<compile_context>
chip_gen: v6e
topology: v6e:2x2x1
jax: 0.10.0
libtpu: 0.0.40
codegen_flags: <defaults>
</compile_context>

<pallas_src>
from functools import partial

import numpy as np
import jax
import jax.numpy as jnp
from jax.experimental import pallas as pl
from jax.experimental.pallas import tpu as pltpu


def _interp_matrix(in_size: int, out_size: int) -> np.ndarray:
    """Row-stochastic 1-D bilinear interpolation matrix matching PyTorch's
    upsample_bilinear2d with align_corners=False (half-pixel centers, src clamped >= 0)."""
    scale = in_size / out_size
    o = np.arange(out_size)
    src = np.maximum((o + 0.5) * scale - 0.5, 0.0)
    i0 = np.minimum(np.floor(src).astype(np.int64), in_size - 1)
    i1 = np.minimum(i0 + 1, in_size - 1)
    lam1 = (src - i0).astype(np.float32)
    lam0 = (1.0 - lam1).astype(np.float32)
    M = np.zeros((out_size, in_size), dtype=np.float32)
    np.add.at(M, (o, i0), lam0)
    np.add.at(M, (o, i1), lam1)
    return M


def _vmem_caps():
    """(tiling_budget_bytes, vmem_limit_bytes) derived from this generation's VMEM.
    v5e/v6e (128 MiB) -> ~70 MiB budget / ~96 MiB limit; v7x (64 MiB/TC) -> ~35 / ~48 MiB.
    Falls back to the conservative v7x numbers if the query is unavailable."""
    try:
        cap = int(getattr(pltpu.get_tpu_info(), "vmem_capacity_bytes", 0))
    except Exception:
        cap = 0
    if not cap:
        cap = 64 * 1024 * 1024
    return int(cap * 0.55), int(cap * 0.75)


def _vmem_bytes(b, h, w, ho, wo, x_isz, m_isz):
    """Worst-case VMEM footprint of one grid step with channel batch b."""
    blocks = 2 * b * (h * w + ho * wo) * x_isz           # double-buffered in + out blocks
    consts = 2 * (ho * h + w * wo) * m_isz               # resident 2-D interp matrices
    bcast = b * (ho * h + w * wo) * m_isz                # in-kernel broadcasts (worst case)
    inter = b * h * wo * (4 + m_isz) + b * ho * wo * 4   # f32 width result (+cast) + f32 out
    return blocks + consts + bcast + inter


def _choose_channel_batch(nc, h, w, ho, wo, x_isz, m_isz, budget,
                          min_steps=4, cap=128):
    """Largest channel batch B that fits the VMEM budget, kept small enough that the
    grid has >= min_steps steps (so both v7x TensorCores get pipelined work). B need
    not divide nc (the wrapper pads), but a nearby exact divisor is preferred."""
    upper = max(1, min(nc, cap))
    best = 1
    for b in range(1, upper + 1):
        if _vmem_bytes(b, h, w, ho, wo, x_isz, m_isz) <= budget:
            best = b
    target = max(1, -(-nc // min_steps))
    b = max(1, min(best, target))
    for d in range(b, max(1, (3 * b) // 4) - 1, -1):     # nearby divisor => no padding
        if nc % d == 0:
            return d
    return b


def _upsample_kernel(x_ref, mh_ref, mwt_ref, o_ref, *, flat_width_pass):
    # x_ref:   (B, H, W)   B channels of the input
    # mh_ref:  (Ho, H)     height interpolation matrix (shared across channels)
    # mwt_ref: (W, Wo)     width interpolation matrix (transposed)
    # o_ref:   (B, Ho, Wo)
    B, H, W = x_ref.shape
    Ho = mh_ref.shape[0]
    Wo = mwt_ref.shape[1]
    mdt = mh_ref.dtype

    x = x_ref[...].astype(mdt)

    if flat_width_pass:
        # H % 8 == 0: (B, H, W) -> (B*H, W) is a layout-free view; one big MXU GEMM.
        t = jnp.dot(x.reshape(B * H, W), mwt_ref[...],
                    preferred_element_type=jnp.float32).reshape(B, H, Wo)
    else:
        # Batched path keeps B large for any H (no "H % 8 -> B = 1" cliff).
        mwtb = jnp.broadcast_to(mwt_ref[...], (B, W, Wo))
        t = jnp.einsum("bhw,bwo->bho", x, mwtb,
                       preferred_element_type=jnp.float32)
    t = t.astype(mdt)

    # Height pass: shared (Ho, H) matrix broadcast ONCE in-kernel (never DMA'd B-fold
    # from HBM, never double-buffered), then a batched MXU matmul with f32 accumulation.
    mhb = jnp.broadcast_to(mh_ref[...], (B, Ho, H))
    y = jnp.einsum("boh,bhw->bow", mhb, t, preferred_element_type=jnp.float32)
    o_ref[...] = y.astype(o_ref.dtype)


@partial(jax.jit, static_argnames=("scale_factor",))
def upsample_bilinear(x: jax.Array, scale_factor: int = 2) -> jax.Array:
    """Pallas equivalent of Upsample(scale_factor, mode='bilinear').forward(x). NCHW."""
    N, C, H, W = x.shape
    Ho, Wo = int(H * scale_factor), int(W * scale_factor)
    nc = N * C

    mat_dtype = jnp.bfloat16 if x.dtype == jnp.bfloat16 else jnp.float32
    x_isz = np.dtype(x.dtype).itemsize
    m_isz = np.dtype(mat_dtype).itemsize

    budget, vmem_limit = _vmem_caps()
    B = _choose_channel_batch(nc, H, W, Ho, Wo, x_isz, m_isz, budget)

    Mh = jnp.asarray(_interp_matrix(H, Ho), dtype=mat_dtype)        # (Ho, H)
    MwT = jnp.asarray(_interp_matrix(W, Wo).T, dtype=mat_dtype)     # (W, Wo)

    xf = x.reshape(nc, H, W)
    nc_pad = -(-nc // B) * B
    if nc_pad != nc:
        # A few dummy channels are far cheaper than a tiny-B launch.
        xf = jnp.pad(xf, ((0, nc_pad - nc), (0, 0), (0, 0)))
    grid = (nc_pad // B,)

    kernel = partial(_upsample_kernel, flat_width_pass=(H % 8 == 0))

    cost = pl.CostEstimate(
        flops=2 * nc_pad * (H * W * Wo + Ho * H * Wo),
        transcendentals=0,
        bytes_accessed=(nc_pad * (H * W + Ho * Wo) * x_isz
                        + (Ho * H + W * Wo) * m_isz),
    )

    out = pl.pallas_call(
        kernel,
        out_shape=jax.ShapeDtypeStruct((nc_pad, Ho, Wo), x.dtype),
        grid_spec=pltpu.PrefetchScalarGridSpec(
            num_scalar_prefetch=0,
            grid=grid,
            in_specs=[
                pl.BlockSpec((B, H, W), lambda b: (b, 0, 0)),
                pl.BlockSpec((Ho, H), lambda b: (0, 0)),     # small resident constant
                pl.BlockSpec((W, Wo), lambda b: (0, 0)),     # small resident constant
            ],
            out_specs=pl.BlockSpec((B, Ho, Wo), lambda b: (b, 0, 0)),
        ),
        compiler_params=pltpu.CompilerParams(
            dimension_semantics=("parallel",),
            vmem_limit_bytes=vmem_limit,
        ),
        cost_estimate=cost,
    )(xf, Mh, MwT)

    if nc_pad != nc:
        out = out[:nc]
    return out.reshape(N, C, Ho, Wo)


if __name__ == "__main__":
    key = jax.random.PRNGKey(0)
    N, C, H, W = 2, 4, 16, 16
    x = jax.random.normal(key, (N, C, H, W), dtype=jnp.float32)

    y = upsample_bilinear(x, scale_factor=2)
    y = jax.block_until_ready(y)

    # Pure-JAX reference using the same separable formulation (sanity check).
    Mh = jnp.asarray(_interp_matrix(H, 2 * H))
    Mw = jnp.asarray(_interp_matrix(W, 2 * W))
    y_ref = jnp.einsum("oh,nchw,pw->ncop", Mh, x, Mw)

    assert y.shape == (N, C, 2 * H, 2 * W), y.shape
    np.testing.assert_allclose(np.asarray(y), np.asarray(y_ref), rtol=1e-5, atol=1e-5)

    print("KERNEL_OK")
</pallas_src>

<mosaic_0001>
module attributes {stable_mosaic.version = 11 : i64} {
  func.func @_upsample_kernel(%arg0: i32, %arg1: memref<2x16x16xf32, #tpu.memory_space<vmem>>, %arg2: memref<32x16xf32, #tpu.memory_space<vmem>>, %arg3: memref<16x32xf32, #tpu.memory_space<vmem>>, %arg4: memref<2x32x32xf32, #tpu.memory_space<vmem>>) attributes {dimension_semantics = [#tpu.dimension_semantics<parallel>], iteration_bounds = array<i64: 4>, scalar_prefetch = 0 : i64, scratch_operands = 0 : i64, tpu.core_type = #tpu.core_type<tc>, window_params = [{transform_indices = @transform_0, window_bounds = array<i64: 2, 16, 16>}, {pipeline_mode = #tpu.pipeline_mode<synchronous>, transform_indices = @transform_1, window_bounds = array<i64: 32, 16>}, {pipeline_mode = #tpu.pipeline_mode<synchronous>, transform_indices = @transform_2, window_bounds = array<i64: 16, 32>}, {transform_indices = @transform_3, window_bounds = array<i64: 2, 32, 32>}]} {
    %c0 = arith.constant 0 : index
    %c0_0 = arith.constant 0 : index
    %c0_1 = arith.constant 0 : index
    %0 = vector.load %arg1[%c0, %c0_0, %c0_1] : memref<2x16x16xf32, #tpu.memory_space<vmem>>, vector<2x16x16xf32>
    %1 = vector.shape_cast %0 : vector<2x16x16xf32> to vector<32x16xf32>
    %c0_2 = arith.constant 0 : index
    %c0_3 = arith.constant 0 : index
    %2 = vector.load %arg3[%c0_2, %c0_3] : memref<16x32xf32, #tpu.memory_space<vmem>>, vector<16x32xf32>
    %cst = arith.constant dense<0.000000e+00> : vector<32x32xf32>
    %3 = tpu.matmul %1, %2, %cst {dimension_numbers = #tpu.dot_dimension_numbers<[1], [0], [0], [1], [0, 0, 1, 1], [], []>} : vector<32x16xf32>, vector<16x32xf32>, vector<32x32xf32> -> vector<32x32xf32>
    %4 = vector.shape_cast %3 : vector<32x32xf32> to vector<2x16x32xf32>
    %c0_4 = arith.constant 0 : index
    %c0_5 = arith.constant 0 : index
    %5 = vector.load %arg2[%c0_4, %c0_5] : memref<32x16xf32, #tpu.memory_space<vmem>>, vector<32x16xf32>
    %6 = vector.shape_cast %5 : vector<32x16xf32> to vector<1x32x16xf32>
    %7 = vector.broadcast %6 : vector<1x32x16xf32> to vector<2x32x16xf32>
    "tpu.trace_start"() <{level = 10 : i32, message = "boh,bhw->bow"}> : () -> ()
    %cst_6 = arith.constant dense<0.000000e+00> : vector<2x32x32xf32>
    %8 = tpu.matmul %7, %4, %cst_6 {dimension_numbers = #tpu.dot_dimension_numbers<[2], [1], [1], [2], [0, 0, 0, 1, 1, 2], [0], [0]>} : vector<2x32x16xf32>, vector<2x16x32xf32>, vector<2x32x32xf32> -> vector<2x32x32xf32>
    "tpu.trace_stop"() : () -> ()
    %c0_7 = arith.constant 0 : index
    %c0_8 = arith.constant 0 : index
    %c0_9 = arith.constant 0 : index
    %9 = vector.load %arg4[%c0_7, %c0_8, %c0_9] : memref<2x32x32xf32, #tpu.memory_space<vmem>>, vector<2x32x32xf32>
    tpu.vector_store %arg4[%c0_7, %c0_8, %c0_9], %8 {strides = array<i32>} : memref<2x32x32xf32, #tpu.memory_space<vmem>>, vector<2x32x32xf32>,
    return
  }
  func.func @transform_0(%arg0: i32) -> (i32, i32, i32) {
    %c0_i32 = arith.constant 0 : i32
    %c0_i32_0 = arith.constant 0 : i32
    %c0_i32_1 = arith.constant 0 : i32
    return %arg0, %c0_i32, %c0_i32_0 : i32, i32, i32
  }
  func.func @transform_1(%arg0: i32) -> (i32, i32) {
    %c0_i32 = arith.constant 0 : i32
    %c0_i32_0 = arith.constant 0 : i32
    %c0_i32_1 = arith.constant 0 : i32
    return %c0_i32, %c0_i32_0 : i32, i32
  }
  func.func @transform_2(%arg0: i32) -> (i32, i32) {
    %c0_i32 = arith.constant 0 : i32
    %c0_i32_0 = arith.constant 0 : i32
    %c0_i32_1 = arith.constant 0 : i32
    return %c0_i32, %c0_i32_0 : i32, i32
  }
  func.func @transform_3(%arg0: i32) -> (i32, i32, i32) {
    %c0_i32 = arith.constant 0 : i32
    %c0_i32_0 = arith.constant 0 : i32
    %c0_i32_1 = arith.constant 0 : i32
    return %arg0, %c0_i32, %c0_i32_0 : i32, i32, i32
  }
}

</mosaic_0001>

<llo_original>
// kernel: upsample_bilinear.1
$region0: #{upsample_bilinear.1}
  #allocation0 [shape = 'u32[]', space=smem, size = 0x4, offset = 0x4, fixed_abs, tag = 'smem constant byte address 0x4 - core index']
  #allocation1 [shape = 'u32[144,128]{1,0:T(1,128)}', space=vmem, size = 0x12000, scoped, tag = 'internal scratch']
  %s0 = inlined_call_operand.hbm [shape: f32[8,16,16], index: 0, kind: input, shape index: {}]
  %s1 = inlined_call_operand.hbm [shape: f32[32,16], index: 1, kind: input, shape index: {}]
  %s2 = inlined_call_operand.hbm [shape: f32[16,32], index: 2, kind: input, shape index: {}]
  %s3 = inlined_call_operand.hbm [shape: f32[8,32,32], index: 3, kind: output, shape index: {}]
  %s4 = sld [smem:[#allocation0]]
  $region57: #{upsample_bilinear.1} parent=0
    _
  %s6 = ssub.s32 1, %s4
  %s7 = scalar_select 0, %s6, %s4
  $region1: #{upsample_bilinear.1} parent=0
    #allocation2 [shape = 'u8[32768]{0}', space=vmem, size = 0x8000, scoped, tag = 'input window, operand 0']
    #allocation3 [shape = 's32[2]{0}', space=sflag, size = 0x8, scoped, tag = 'scoped memory for upsample_bilinear.1']
    #allocation4 [shape = 's32[2]{0}', space=sflag, size = 0x8, scoped, tag = 'scoped memory for upsample_bilinear.1']
    #allocation5 [shape = 'u8[16384]{0}', space=vmem, size = 0x4000, scoped, tag = 'input window, operand 1, single buffered']
    #allocation6 [shape = 's32[1]{0}', space=sflag, size = 0x4, scoped, tag = 'scoped memory for upsample_bilinear.1']
    #allocation7 [shape = 'u8[8192]{0}', space=vmem, size = 0x2000, scoped, tag = 'input window, operand 2, single buffered']
    #allocation8 [shape = 'u8[65536]{0}', space=vmem, size = 0x10000, scoped, tag = 'output window, operand 0']
    %8 = vsyncpa [#allocation3], 0
    %s9 = scalar_lea.sflag [#allocation3], 1
    %10 = vsyncpa %s9, 0
    %11 = vsyncpa [#allocation6], 0
    %12 = vsyncpa [#allocation4], 0
    %s13 = scalar_lea.sflag [#allocation4], 1
    %14 = vsyncpa %s13, 0
    loop: start=0, step=1, limit=6
    $region2: #{upsample_bilinear.1} parent=1 // loop_pre_header
      _
    $region3: #{upsample_bilinear.1} parent=1 // loop_header
      %s16 = sphi 0, %s20
      %p17 = scmp.ge.s32.totalorder %s16, 6
      %s26 = sphi 0, %s28
      %s29 = sphi 0, %s26
      %s30 = sphi 0, %s29
      %s46 = sphi 0, %s30
      %s50 = sphi 0, %s50
      %s52 = sphi 0, %s50
      %s53 = sphi 0, %s52
      %s67 = sphi 0, %s53
      %s71 = sphi 0, %s71
      %s73 = sphi 0, %s71
      %s74 = sphi 0, %s73
      %s88 = sphi 0, %s74
      %s94 = sphi 0, %s96
      %s97 = sphi 0, %s94
      %s98 = sphi 0, %s97
      %s114 = sphi 0, %s98
    $region4: #{upsample_bilinear.1} parent=1 // loop_header_branch
      %19 = sbr.rel (%p17) target = $region8
    $region5: #{upsample_bilinear.1} parent=1 // loop_body
      %s21 = ssub.s32 %s16, 1
      %s22 = ssub.s32 %s16, 2
      %s23 = sadd.s32 %s16, 1
      %s24 = ssub.s32 %s16, %s23
      %p25 = scmp.eq.s32.totalorder %s24, 0
      %s27 = sadd.s32 %s26, 1
      %s28 = scalar_select %p25, %s26, %s27
      %p31 = pneg %p25
      %p32 = scmp.eq.s32.totalorder %s16, 3
      %p33 = por %p31, %p32
      %p34 = scmp.ne.s32.totalorder %s26, %s29
      %p35 = scmp.eq.s32.totalorder %s16, 0
      %p36 = por %p34, %p35
      %p37 = scmp.ne.s32.totalorder %s26, %s29
      %p38 = scmp.eq.s32.totalorder %s21, 3
      %p39 = por %p37, %p38
      %p40 = scmp.ne.s32.totalorder %s29, %s30
      %p41 = scmp.eq.s32.totalorder %s21, 0
      %p42 = por %p40, %p41
      %p43 = scmp.ne.s32.totalorder %s29, %s30
      %p44 = scmp.eq.s32.totalorder %s22, 3
      %p45 = por %p43, %p44
      %p47 = scmp.ne.s32.totalorder %s30, %s46
      %p48 = scmp.eq.s32.totalorder %s22, 0
      %p49 = por %p47, %p48
      %s51 = sadd.s32 %s50, 1
      %p54 = scmp.eq.s32.totalorder %s16, 3
      %p55 = scmp.ne.s32.totalorder %s50, %s52
      %p56 = scmp.eq.s32.totalorder %s16, 0
      %p57 = por %p55, %p56
      %p58 = scmp.ne.s32.totalorder %s50, %s52
      %p59 = scmp.eq.s32.totalorder %s21, 3
      %p60 = por %p58, %p59
      %p61 = scmp.ne.s32.totalorder %s52, %s53
      %p62 = scmp.eq.s32.totalorder %s21, 0
      %p63 = por %p61, %p62
      %p64 = scmp.ne.s32.totalorder %s52, %s53
      %p65 = scmp.eq.s32.totalorder %s22, 3
      %p66 = por %p64, %p65
      %p68 = scmp.ne.s32.totalorder %s53, %s67
      %p69 = scmp.eq.s32.totalorder %s22, 0
      %p70 = por %p68, %p69
      %s72 = sadd.s32 %s71, 1
      %p75 = scmp.eq.s32.totalorder %s16, 3
      %p76 = scmp.ne.s32.totalorder %s71, %s73
      %p77 = scmp.eq.s32.totalorder %s16, 0
      %p78 = por %p76, %p77
      %p79 = scmp.ne.s32.totalorder %s71, %s73
      %p80 = scmp.eq.s32.totalorder %s21, 3
      %p81 = por %p79, %p80
      %p82 = scmp.ne.s32.totalorder %s73, %s74
      %p83 = scmp.eq.s32.totalorder %s21, 0
      %p84 = por %p82, %p83
      %p85 = scmp.ne.s32.totalorder %s73, %s74
      %p86 = scmp.eq.s32.totalorder %s22, 3
      %p87 = por %p85, %p86
      %p89 = scmp.ne.s32.totalorder %s74, %s88
      %p90 = scmp.eq.s32.totalorder %s22, 0
      %p91 = por %p89, %p90
      %s92 = ssub.s32 %s16, %s23
      %p93 = scmp.eq.s32.totalorder %s92, 0
      %s95 = sadd.s32 %s94, 1
      %s96 = scalar_select %p93, %s94, %s95
      %p99 = pneg %p93
      %p100 = scmp.eq.s32.totalorder %s16, 3
      %p101 = por %p99, %p100
      %p102 = scmp.ne.s32.totalorder %s94, %s97
      %p103 = scmp.eq.s32.totalorder %s16, 0
      %p104 = por %p102, %p103
      %p105 = scmp.ne.s32.totalorder %s94, %s97
      %p106 = scmp.eq.s32.totalorder %s21, 3
      %p107 = por %p105, %p106
      %p108 = scmp.ne.s32.totalorder %s97, %s98
      %p109 = scmp.eq.s32.totalorder %s21, 0
      %p110 = por %p108, %p109
      %p111 = scmp.ne.s32.totalorder %s97, %s98
      %p112 = scmp.eq.s32.totalorder %s22, 3
      %p113 = por %p111, %p112
      %p115 = scmp.ne.s32.totalorder %s98, %s114
      %p116 = scmp.eq.s32.totalorder %s22, 0
      %p117 = por %p115, %p116
      %p118 = scmp.le.s32.totalorder 1, %s16
      %p119 = scmp.lt.s32.totalorder %s16, 5
      %p120 = pnand %p118, %p119
      %p121 = pneg %p120
      // Predicated region
      $region9: #{upsample_bilinear.1} parent=5 // pred_check
        _
      $region10: #{upsample_bilinear.1} parent=5 // pred_check_branch
        %123 = sbr.rel (%p120) target = $region12
      $region11: #{upsample_bilinear.1} parent=5 // pred_region
        %s124 = ssub.s32 %s16, 1
        // Predicated region
        $region13: #{upsample_bilinear.1} parent=11 // pred_check
          %p125 = pneg %p63
        $region14: #{upsample_bilinear.1} parent=11 // pred_check_branch
          %127 = sbr.rel (%p125) target = $region16
        $region15: #{upsample_bilinear.1} parent=11 // pred_region
          %s129 = ssub.s32 512, 512
          %130 = vsyncadd [#allocation6], %s129
          %s131 = sshll.u32 [#allocation5], 4
          %s132 = int_to_ptr.vmem [resolvable:$true] %s131
          %137 = dma.hbm_to_vmem [thread:$0]  %s1, 512, %s132, [#allocation6], 128, 128, 8
        $region16: #{upsample_bilinear.1} parent=11 // pred_fallthru
          _
        // Predicated region
        $region17: #{upsample_bilinear.1} parent=11 // pred_check
          %p138 = pneg %p84
        $region18: #{upsample_bilinear.1} parent=11 // pred_check_branch
          %140 = sbr.rel (%p138) target = $region20
        $region19: #{upsample_bilinear.1} parent=11 // pred_region
          %s142 = ssub.s32 256, 256
          %143 = vsyncadd [#allocation6], %s142
          %s144 = sshll.u32 [#allocation7], 4
          %s145 = int_to_ptr.vmem [resolvable:$true] %s144
          %150 = dma.hbm_to_vmem [thread:$0]  %s2, 256, %s145, [#allocation6], 128, 128, 8
        $region20: #{upsample_bilinear.1} parent=11 // pred_fallthru
          _
      $region12: #{upsample_bilinear.1} parent=5 // pred_fallthru
        _
      %p151 = scmp.lt.s32.totalorder %s16, 4
      // Predicated region
      $region21: #{upsample_bilinear.1} parent=5 // pred_check
        %p152 = pneg %p151
      $region22: #{upsample_bilinear.1} parent=5 // pred_check_branch
        %154 = sbr.rel (%p152) target = $region24
      $region23: #{upsample_bilinear.1} parent=5 // pred_region
        // Predicated region
        $region25: #{upsample_bilinear.1} parent=23 // pred_check
          %p155 = pneg %p36
        $region26: #{upsample_bilinear.1} parent=23 // pred_check_branch
          %157 = sbr.rel (%p155) target = $region28
        $region27: #{upsample_bilinear.1} parent=23 // pred_region
          %s158 = sand.u32 %s26, 1
          %s159 = scalar_lea.sflag [#allocation3], %s158
          %s160 = sand.u32 %s26, 1
          %s161 = smul.addr %s160, 32
          %s162 = scalar_lea.vmem [#allocation2], %s161
          %s163 = smul.u32 2, %s16
          %s165 = ssub.s32 512, 512
          %166 = vsyncadd %s159, %s165
          %s167 = smul.addr %s163, 2
          %s168 = smul.addr %s167, 128
          %s169 = scalar_lea.hbm %s0, %s168
          %s170 = sshll.u32 %s162, 4
          %s171 = int_to_ptr.vmem [resolvable:$true] %s170
          %176 = dma.hbm_to_vmem [thread:$0]  %s169, 512, %s171, %s159, 128, 128, 8
        $region28: #{upsample_bilinear.1} parent=23 // pred_fallthru
          _
      $region24: #{upsample_bilinear.1} parent=5 // pred_fallthru
        _
      %p177 = scmp.le.s32.totalorder 1, %s16
      %p178 = scmp.lt.s32.totalorder %s16, 5
      %p179 = pnand %p177, %p178
      %p180 = pneg %p179
      // Predicated region
      $region29: #{upsample_bilinear.1} parent=5 // pred_check
        _
      $region30: #{upsample_bilinear.1} parent=5 // pred_check_branch
        %182 = sbr.rel (%p179) target = $region32
      $region31: #{upsample_bilinear.1} parent=5 // pred_region
        %s183 = ssub.s32 %s16, 1
        %s184 = sand.u32 %s29, 1
        %s185 = scalar_lea.sflag [#allocation3], %s184
        %s186 = sand.u32 %s29, 1
        %s187 = smul.addr %s186, 32
        %s188 = scalar_lea.vmem [#allocation2], %s187
        // Predicated region
        $region33: #{upsample_bilinear.1} parent=31 // pred_check
          %p189 = pneg %p42
        $region34: #{upsample_bilinear.1} parent=31 // pred_check_branch
          %191 = sbr.rel (%p189) target = $region36
        $region35: #{upsample_bilinear.1} parent=31 // pred_region
          %192 = dma.done %s185, 512
        $region36: #{upsample_bilinear.1} parent=31 // pred_fallthru
          _
        // Predicated region
        $region37: #{upsample_bilinear.1} parent=31 // pred_check
          %p193 = pneg %p63
        $region38: #{upsample_bilinear.1} parent=31 // pred_check_branch
          %195 = sbr.rel (%p193) target = $region40
        $region39: #{upsample_bilinear.1} parent=31 // pred_region
          %196 = dma.done [#allocation6], 512
        $region40: #{upsample_bilinear.1} parent=31 // pred_fallthru
          _
        // Predicated region
        $region41: #{upsample_bilinear.1} parent=31 // pred_check
          %p197 = pneg %p84
        $region42: #{upsample_bilinear.1} parent=31 // pred_check_branch
          %199 = sbr.rel (%p197) target = $region44
        $region43: #{upsample_bilinear.1} parent=31 // pred_region
          %200 = dma.done [#allocation6], 256
        $region44: #{upsample_bilinear.1} parent=31 // pred_fallthru
          _
        %s201 = sand.u32 %s29, 1
        %s202 = scalar_lea.sflag [#allocation3], %s201
        %s203 = sand.u32 %s29, 1
        %s204 = smul.addr %s203, 32
        %s205 = scalar_lea.vmem [#allocation2], %s204
        %p206 = pneg %p42
        %p207 = pneg %p39
        %p208 = pneg %p63
        %p209 = pneg %p60
        %p210 = pneg %p84
        %p211 = pneg %p81
        %p212 = pneg %p110
        %p213 = pneg %p107
        %s214 = sand.u32 %s97, 1
        %s215 = scalar_lea.sflag [#allocation4], %s214
        %s216 = sand.u32 %s97, 1
        %s217 = smul.addr %s216, 64
        %s218 = scalar_lea.vmem [#allocation8], %s217
        %s219 = smul.u32 2, %s21
        %s220 = smul.u32 2, %s21
        %v221 = vld [vmem:[%s188] sm:$0xff]
        %v222 = vld [vmem:[%s188 + $0x8] sm:$0xff]
        %v223 = vld [vmem:[%s188 + $0x10] sm:$0xff]
        %v224 = vld [vmem:[%s188 + $0x18] sm:$0xff]
        %v225 = vld [vmem:[#allocation7] sm:$0xff]
        %v226 = vld [vmem:[#allocation7 + $0x8] sm:$0xff]
        %vm227 = vcmask 130048
        %v229 = vsel %vm227, %v221, 0
        %v232 = vsel %vm227, %v222, 0
        %v235 = vsel %vm227, %v223, 0
        %v238 = vsel %vm227, %v224, 0
        %240 = vmatprep.subr.mxu0 0.0
        %241 = vmatpush1.msra.mxu0 0.0
        %242 = vmatprep.subr.mxu0 0.0
        %243 = vmatpush1.msra.mxu0 0.0
        %244 = vmatprep.subr.mxu0 0.0
        %245 = vmatpush1.msra.mxu0 0.0
        %246 = vmatprep.subr.mxu0 0.0
        %247 = vmatpush1.msra.mxu0 0.0
        %248 = vmatprep.subr.mxu0 0.0
        %249 = vmatpush1.msra.mxu0 0.0
        %250 = vmatprep.subr.mxu0 0.0
        %251 = vmatpush1.msra.mxu0 0.0
        %252 = vmatprep.subr.mxu0 0.0
        %253 = vmatpush1.msra.mxu0 0.0
        %254 = vmatprep.subr.mxu0 0.0
        %255 = vmatpush1.msra.mxu0 0.0
        %256 = vmatprep.subr.mxu0 0.0
        %257 = vmatpush1.msra.mxu0 0.0
        %258 = vmatprep.subr.mxu0 0.0
        %259 = vmatpush1.msra.mxu0 0.0
        %260 = vmatprep.subr.mxu0 0.0
        %261 = vmatpush1.msra.mxu0 0.0
        %262 = vmatprep.subr.mxu0 0.0
        %263 = vmatpush1.msra.mxu0 0.0
        %264 = vmatprep.subr.mxu0 0.0
        %265 = vmatpush1.msra.mxu0 0.0
        %266 = vmatprep.subr.mxu0 0.0
        %267 = vmatpush1.msra.mxu0 0.0
        %268 = vmatprep.subr.mxu0 0.0
        %269 = vmatpush1.msra.mxu0 %v226
        %270 = vmatprep.subr.mxu0 0.0
        %271 = vmatpush1.msra.mxu0 %v225
        %272 = vmatprep.subr.mxu0 0.0
        %273 = vmatpush2.msra.mxu0 0.0
        %274 = vmatprep.subr.mxu0 0.0
        %275 = vmatpush2.msra.mxu0 0.0
        %276 = vmatprep.subr.mxu0 0.0
        %277 = vmatpush2.msra.mxu0 0.0
        %278 = vmatprep.subr.mxu0 0.0
        %279 = vmatpush2.msra.mxu0 0.0
        %280 = vmatprep.subr.mxu0 0.0
        %281 = vmatpush2.msra.mxu0 0.0
        %282 = vmatprep.subr.mxu0 0.0
        %283 = vmatpush2.msra.mxu0 0.0
        %284 = vmatprep.subr.mxu0 0.0
        %285 = vmatpush2.msra.mxu0 0.0
        %286 = vmatprep.subr.mxu0 0.0
        %287 = vmatpush2.msra.mxu0 0.0
        %288 = vmatprep.subr.mxu0 0.0
        %289 = vmatpush2.msra.mxu0 0.0
        %290 = vmatprep.subr.mxu0 0.0
        %291 = vmatpush2.msra.mxu0 0.0
        %292 = vmatprep.subr.mxu0 0.0
        %293 = vmatpush2.msra.mxu0 0.0
        %294 = vmatprep.subr.mxu0 0.0
        %295 = vmatpush2.msra.mxu0 0.0
        %296 = vmatprep.subr.mxu0 0.0
        %297 = vmatpush2.msra.mxu0 0.0
        %298 = vmatprep.subr.mxu0 0.0
        %299 = vmatpush2.msra.mxu0 0.0
        %300 = vmatprep.subr.mxu0 0.0
        %301 = vmatpush2.msra.mxu0 0.0
        %302 = vmatprep.subr.mxu0 0.0
        %303 = vmatpush2.msra.mxu0 0.0
        %304 = vmatprep.mubr.f32.mxu0 0.0
        %305 = vmatmul.mubr.f32.gmra.mxu0 %v229
        %v306 = vpop.f32.mrf.mxu0
        %v307 = vadd.f32 0.0, %v306
        %v308 = vpop.f32.mrf.mxu0
        %309 = vmatprep.mubr.f32.mxu0 0.0
        %310 = vmatmul.mubr.f32.gmra.mxu0 %v232
        %v311 = vpop.f32.mrf.mxu0
        %v312 = vadd.f32 0.0, %v311
        %v313 = vpop.f32.mrf.mxu0
        %314 = vmatprep.mubr.f32.mxu0 0.0
        %315 = vmatmul.mubr.f32.gmra.mxu0 %v235
        %v316 = vpop.f32.mrf.mxu0
        %v317 = vadd.f32 0.0, %v316
        %v318 = vpop.f32.mrf.mxu0
        %319 = vmatprep.mubr.f32.mxu0 0.0
        %320 = vmatmul.mubr.f32.gmra.mxu0 %v238
        %v321 = vpop.f32.mrf.mxu0
        %v322 = vadd.f32 0.0, %v321
        %v323 = vpop.f32.mrf.mxu0
        %324 = vdwg.mxu0
        %v325 = vld [vmem:[#allocation5] sm:$0xff]
        %v326 = vld [vmem:[#allocation5 + $0x8] sm:$0xff]
        %v327 = vld [vmem:[#allocation5 + $0x10] sm:$0xff]
        %v328 = vld [vmem:[#allocation5 + $0x18] sm:$0xff]
        %v330 = vsel %vm227, %v325, 0
        %v333 = vsel %vm227, %v326, 0
        %v336 = vsel %vm227, %v327, 0
        %v339 = vsel %vm227, %v328, 0
        %341 = vmatprep.subr.mxu0 0.0
        %342 = vmatpush1.msra.mxu0 0.0
        %343 = vmatprep.subr.mxu0 0.0
        %344 = vmatpush1.msra.mxu0 0.0
        %345 = vmatprep.subr.mxu0 0.0
        %346 = vmatpush1.msra.mxu0 0.0
        %347 = vmatprep.subr.mxu0 0.0
        %348 = vmatpush1.msra.mxu0 0.0
        %349 = vmatprep.subr.mxu0 0.0
        %350 = vmatpush1.msra.mxu0 0.0
        %351 = vmatprep.subr.mxu0 0.0
        %352 = vmatpush1.msra.mxu0 0.0
        %353 = vmatprep.subr.mxu0 0.0
        %354 = vmatpush1.msra.mxu0 0.0
        %355 = vmatprep.subr.mxu0 0.0
        %356 = vmatpush1.msra.mxu0 0.0
        %357 = vmatprep.subr.mxu0 0.0
        %358 = vmatpush1.msra.mxu0 0.0
        %359 = vmatprep.subr.mxu0 0.0
        %360 = vmatpush1.msra.mxu0 0.0
        %361 = vmatprep.subr.mxu0 0.0
        %362 = vmatpush1.msra.mxu0 0.0
        %363 = vmatprep.subr.mxu0 0.0
        %364 = vmatpush1.msra.mxu0 0.0
        %365 = vmatprep.subr.mxu0 0.0
        %366 = vmatpush1.msra.mxu0 0.0
        %367 = vmatprep.subr.mxu0 0.0
        %368 = vmatpush1.msra.mxu0 0.0
        %369 = vmatprep.subr.mxu0 0.0
        %370 = vmatpush1.msra.mxu0 %v312
        %371 = vmatprep.subr.mxu0 0.0
        %372 = vmatpush1.msra.mxu0 %v307
        %373 = vmatprep.subr.mxu0 0.0
        %374 = vmatpush2.msra.mxu0 0.0
        %375 = vmatprep.subr.mxu0 0.0
        %376 = vmatpush2.msra.mxu0 0.0
        %377 = vmatprep.subr.mxu0 0.0
        %378 = vmatpush2.msra.mxu0 0.0
        %379 = vmatprep.subr.mxu0 0.0
        %380 = vmatpush2.msra.mxu0 0.0
        %381 = vmatprep.subr.mxu0 0.0
        %382 = vmatpush2.msra.mxu0 0.0
        %383 = vmatprep.subr.mxu0 0.0
        %384 = vmatpush2.msra.mxu0 0.0
        %385 = vmatprep.subr.mxu0 0.0
        %386 = vmatpush2.msra.mxu0 0.0
        %387 = vmatprep.subr.mxu0 0.0
        %388 = vmatpush2.msra.mxu0 0.0
        %389 = vmatprep.subr.mxu0 0.0
        %390 = vmatpush2.msra.mxu0 0.0
        %391 = vmatprep.subr.mxu0 0.0
        %392 = vmatpush2.msra.mxu0 0.0
        %393 = vmatprep.subr.mxu0 0.0
        %394 = vmatpush2.msra.mxu0 0.0
        %395 = vmatprep.subr.mxu0 0.0
        %396 = vmatpush2.msra.mxu0 0.0
        %397 = vmatprep.subr.mxu0 0.0
        %398 = vmatpush2.msra.mxu0 0.0
        %399 = vmatprep.subr.mxu0 0.0
        %400 = vmatpush2.msra.mxu0 0.0
        %401 = vmatprep.subr.mxu0 0.0
        %402 = vmatpush2.msra.mxu0 0.0
        %403 = vmatprep.subr.mxu0 0.0
        %404 = vmatpush2.msra.mxu0 0.0
        %405 = vmatprep.mubr.f32.mxu0 0.0
        %406 = vmatmul.mubr.f32.gmra.mxu0 %v330
        %v407 = vpop.f32.mrf.mxu0
        %v408 = vadd.f32 0.0, %v407
        %v409 = vpop.f32.mrf.mxu0
        %410 = vmatprep.mubr.f32.mxu0 0.0
        %411 = vmatmul.mubr.f32.gmra.mxu0 %v333
        %v412 = vpop.f32.mrf.mxu0
        %v413 = vadd.f32 0.0, %v412
        %v414 = vpop.f32.mrf.mxu0
        %415 = vmatprep.mubr.f32.mxu0 0.0
        %416 = vmatmul.mubr.f32.gmra.mxu0 %v336
        %v417 = vpop.f32.mrf.mxu0
        %v418 = vadd.f32 0.0, %v417
        %v419 = vpop.f32.mrf.mxu0
        %420 = vmatprep.mubr.f32.mxu0 0.0
        %421 = vmatmul.mubr.f32.gmra.mxu0 %v339
        %v422 = vpop.f32.mrf.mxu0
        %v423 = vadd.f32 0.0, %v422
        %v424 = vpop.f32.mrf.mxu0
        %425 = vdwg.mxu0
        %426 = vmatprep.subr.mxu0 0.0
        %427 = vmatpush1.msra.mxu0 0.0
        %428 = vmatprep.subr.mxu0 0.0
        %429 = vmatpush1.msra.mxu0 0.0
        %430 = vmatprep.subr.mxu0 0.0
        %431 = vmatpush1.msra.mxu0 0.0
        %432 = vmatprep.subr.mxu0 0.0
        %433 = vmatpush1.msra.mxu0 0.0
        %434 = vmatprep.subr.mxu0 0.0
        %435 = vmatpush1.msra.mxu0 0.0
        %436 = vmatprep.subr.mxu0 0.0
        %437 = vmatpush1.msra.mxu0 0.0
        %438 = vmatprep.subr.mxu0 0.0
        %439 = vmatpush1.msra.mxu0 0.0
        %440 = vmatprep.subr.mxu0 0.0
        %441 = vmatpush1.msra.mxu0 0.0
        %442 = vmatprep.subr.mxu0 0.0
        %443 = vmatpush1.msra.mxu0 0.0
        %444 = vmatprep.subr.mxu0 0.0
        %445 = vmatpush1.msra.mxu0 0.0
        %446 = vmatprep.subr.mxu0 0.0
        %447 = vmatpush1.msra.mxu0 0.0
        %448 = vmatprep.subr.mxu0 0.0
        %449 = vmatpush1.msra.mxu0 0.0
        %450 = vmatprep.subr.mxu0 0.0
        %451 = vmatpush1.msra.mxu0 0.0
        %452 = vmatprep.subr.mxu0 0.0
        %453 = vmatpush1.msra.mxu0 0.0
        %454 = vmatprep.subr.mxu0 0.0
        %455 = vmatpush1.msra.mxu0 %v322
        %456 = vmatprep.subr.mxu0 0.0
        %457 = vmatpush1.msra.mxu0 %v317
        %458 = vmatprep.subr.mxu0 0.0
        %459 = vmatpush2.msra.mxu0 0.0
        %460 = vmatprep.subr.mxu0 0.0
        %461 = vmatpush2.msra.mxu0 0.0
        %462 = vmatprep.subr.mxu0 0.0
        %463 = vmatpush2.msra.mxu0 0.0
        %464 = vmatprep.subr.mxu0 0.0
        %465 = vmatpush2.msra.mxu0 0.0
        %466 = vmatprep.subr.mxu0 0.0
        %467 = vmatpush2.msra.mxu0 0.0
        %468 = vmatprep.subr.mxu0 0.0
        %469 = vmatpush2.msra.mxu0 0.0
        %470 = vmatprep.subr.mxu0 0.0
        %471 = vmatpush2.msra.mxu0 0.0
        %472 = vmatprep.subr.mxu0 0.0
        %473 = vmatpush2.msra.mxu0 0.0
        %474 = vmatprep.subr.mxu0 0.0
        %475 = vmatpush2.msra.mxu0 0.0
        %476 = vmatprep.subr.mxu0 0.0
        %477 = vmatpush2.msra.mxu0 0.0
        %478 = vmatprep.subr.mxu0 0.0
        %479 = vmatpush2.msra.mxu0 0.0
        %480 = vmatprep.subr.mxu0 0.0
        %481 = vmatpush2.msra.mxu0 0.0
        %482 = vmatprep.subr.mxu0 0.0
        %483 = vmatpush2.msra.mxu0 0.0
        %484 = vmatprep.subr.mxu0 0.0
        %485 = vmatpush2.msra.mxu0 0.0
        %486 = vmatprep.subr.mxu0 0.0
        %487 = vmatpush2.msra.mxu0 0.0
        %488 = vmatprep.subr.mxu0 0.0
        %489 = vmatpush2.msra.mxu0 0.0
        %490 = vmatprep.mubr.f32.mxu0 0.0
        %491 = vmatmul.mubr.f32.gmra.mxu0 %v330
        %v492 = vpop.f32.mrf.mxu0
        %v493 = vadd.f32 0.0, %v492
        %v494 = vpop.f32.mrf.mxu0
        %495 = vmatprep.mubr.f32.mxu0 0.0
        %496 = vmatmul.mubr.f32.gmra.mxu0 %v333
        %v497 = vpop.f32.mrf.mxu0
        %v498 = vadd.f32 0.0, %v497
        %v499 = vpop.f32.mrf.mxu0
        %500 = vmatprep.mubr.f32.mxu0 0.0
        %501 = vmatmul.mubr.f32.gmra.mxu0 %v336
        %v502 = vpop.f32.mrf.mxu0
        %v503 = vadd.f32 0.0, %v502
        %v504 = vpop.f32.mrf.mxu0
        %505 = vmatprep.mubr.f32.mxu0 0.0
        %506 = vmatmul.mubr.f32.gmra.mxu0 %v339
        %v507 = vpop.f32.mrf.mxu0
        %v508 = vadd.f32 0.0, %v507
        %v509 = vpop.f32.mrf.mxu0
        %510 = vdwg.mxu0
        %vm511 = vcmask 261120
        %512 = vst.msk [vmem:[%s218] sm:$0xff] %vm511, %v408
        %513 = vst.msk [vmem:[%s218 + $0x8] sm:$0xff] %vm511, %v413
        %514 = vst.msk [vmem:[%s218 + $0x10] sm:$0xff] %vm511, %v418
        %515 = vst.msk [vmem:[%s218 + $0x18] sm:$0xff] %vm511, %v423
        %516 = vst.msk [vmem:[%s218 + $0x20] sm:$0xff] %vm511, %v493
        %517 = vst.msk [vmem:[%s218 + $0x28] sm:$0xff] %vm511, %v498
        %518 = vst.msk [vmem:[%s218 + $0x30] sm:$0xff] %vm511, %v503
        %519 = vst.msk [vmem:[%s218 + $0x38] sm:$0xff] %vm511, %v508
        %s520 = sand.u32 %s97, 1
        %s521 = scalar_lea.sflag [#allocation4], %s520
        %s522 = sand.u32 %s97, 1
        %s523 = smul.addr %s522, 64
        %s524 = scalar_lea.vmem [#allocation8], %s523
        // Predicated region
        $region45: #{upsample_bilinear.1} parent=31 // pred_check
          %p525 = pneg %p107
        $region46: #{upsample_bilinear.1} parent=31 // pred_check_branch
          %527 = sbr.rel (%p525) target = $region48
        $region47: #{upsample_bilinear.1} parent=31 // pred_region
          %s528 = smul.u32 2, %s21
          %s530 = ssub.s32 1024, 1024
          %531 = vsyncadd %s521, %s530
          %s532 = smul.addr %s528, 4
          %s533 = smul.addr %s532, 128
          %s534 = scalar_lea.hbm %s3, %s533
          %s535 = sshll.u32 %s524, 4
          %s536 = int_to_ptr.vmem [resolvable:$true] %s535
          %541 = dma.vmem_to_hbm [thread:$0]  %s536, 1024, %s534, %s521, 128, 128, 8
        $region48: #{upsample_bilinear.1} parent=31 // pred_fallthru
          _
      $region32: #{upsample_bilinear.1} parent=5 // pred_fallthru
        _
      %p542 = scmp.le.s32.totalorder 2, %s16
      // Predicated region
      $region49: #{upsample_bilinear.1} parent=5 // pred_check
        %p543 = pneg %p542
      $region50: #{upsample_bilinear.1} parent=5 // pred_check_branch
        %545 = sbr.rel (%p543) target = $region52
      $region51: #{upsample_bilinear.1} parent=5 // pred_region
        %s546 = ssub.s32 %s16, 2
        // Predicated region
        $region53: #{upsample_bilinear.1} parent=51 // pred_check
          %p547 = pneg %p113
        $region54: #{upsample_bilinear.1} parent=51 // pred_check_branch
          %549 = sbr.rel (%p547) target = $region56
        $region55: #{upsample_bilinear.1} parent=51 // pred_region
          %s550 = sand.u32 %s98, 1
          %s551 = scalar_lea.sflag [#allocation4], %s550
          %s552 = sand.u32 %s98, 1
          %s553 = smul.addr %s552, 64
          %s554 = scalar_lea.vmem [#allocation8], %s553
          %555 = dma.done %s551, 1024
        $region56: #{upsample_bilinear.1} parent=51 // pred_fallthru
          _
      $region52: #{upsample_bilinear.1} parent=5 // pred_fallthru
        _
    $region6: #{upsample_bilinear.1} parent=1 // loop_footer
      %s20 = sadd.s32 1, %s16
    $region7: #{upsample_bilinear.1} parent=1 // loop_footer_branch
      %15 = sbr.rel target = $region3
    $region8: #{upsample_bilinear.1} parent=1 // loop_exit
      _
    %556 = vsyncpa [#allocation3], 1
    %s557 = scalar_lea.sflag [#allocation3], 1
    %558 = vsyncpa %s557, 1
    %559 = vsyncpa [#allocation6], 1
    %560 = vsyncpa [#allocation4], 1
    %s561 = scalar_lea.sflag [#allocation4], 1
    %562 = vsyncpa %s561, 1

</llo_original>
